<compile_context>
chip_gen: v5e
topology: v5e:2x2
jax: 0.10.0
libtpu: 0.0.40
codegen_flags: <defaults>
</compile_context>

<pallas_src>
import functools

import jax
import jax.numpy as jnp
from jax.experimental import pallas as pl
from jax.experimental.pallas import tpu as pltpu


def _round_up(x, m):
    return ((x + m - 1) // m) * m


@functools.lru_cache(maxsize=None)
def _vmem_budget_bytes():
    """Generation-aware VMEM budget (leave ~28% headroom for Mosaic scratch)."""
    try:
        cap = int(pltpu.get_tpu_info().vmem_capacity_bytes)
    except Exception:
        cap = 64 * 1024 * 1024  # conservative: v7x physical VMEM per core
    return int(cap * 0.72)


# --------------------------------------------------------------------------
# Kernel bodies
# --------------------------------------------------------------------------
def _mm_kernel(x_ref, w_ref, o_ref):
    """Single-K-tile output block, no bias, no scratch."""
    o_ref[...] = jnp.dot(
        x_ref[...], w_ref[...], preferred_element_type=jnp.float32
    ).astype(o_ref.dtype)


def _mm_bias_kernel(x_ref, w_ref, b_ref, o_ref):
    """Single-K-tile output block + bias."""
    o_ref[...] = (
        jnp.dot(x_ref[...], w_ref[...], preferred_element_type=jnp.float32)
        + b_ref[...]
    ).astype(o_ref.dtype)


def _mm_acc_kernel(x_ref, w_ref, o_ref, acc_ref):
    """K-tiled reduction (K is the last, 'arbitrary' grid axis), no bias."""
    k = pl.program_id(2)

    @pl.when(k == 0)
    def _():
        acc_ref[...] = jnp.zeros_like(acc_ref)

    acc_ref[...] += jnp.dot(
        x_ref[...], w_ref[...], preferred_element_type=jnp.float32
    )

    @pl.when(k == pl.num_programs(2) - 1)
    def _():
        o_ref[...] = acc_ref[...].astype(o_ref.dtype)


def _mm_bias_acc_kernel(x_ref, w_ref, b_ref, o_ref, acc_ref):
    """K-tiled reduction + bias on finalize."""
    k = pl.program_id(2)

    @pl.when(k == 0)
    def _():
        acc_ref[...] = jnp.zeros_like(acc_ref)

    acc_ref[...] += jnp.dot(
        x_ref[...], w_ref[...], preferred_element_type=jnp.float32
    )

    @pl.when(k == pl.num_programs(2) - 1)
    def _():
        o_ref[...] = (acc_ref[...] + b_ref[...]).astype(o_ref.dtype)


# --------------------------------------------------------------------------
# Tile selection
# --------------------------------------------------------------------------
def _fit(dim_padded, cap, align):
    """Split `dim_padded` into the fewest tiles of (aligned) size <= ~cap."""
    cap = max(align, min(cap, dim_padded))
    n = -(-dim_padded // cap)                      # number of tiles
    t = _round_up(-(-dim_padded // n), align)      # balanced, aligned tile
    return t, n * t


def _select_tiles(M, K, N, xbytes, obytes, tm_cap, tn_cap, tk_cap, budget):
    sub = 8 if xbytes >= 4 else 16                 # sublane multiple for x/w
    Mp0 = _round_up(M, sub)
    Kp0 = _round_up(K, 128)
    Np0 = _round_up(N, 128)

    def working_set(tm, tn, tk, nk):
        acc = tm * tn * 4 if nk > 1 else 0         # f32 accumulator scratch
        return (2 * (tm * tk + tk * tn) * xbytes   # double-buffered x / w
                + 2 * tm * tn * obytes             # double-buffered out
                + acc + 2 * tn * 4)                # bias tile

    cm, cn, ck = tm_cap, tn_cap, tk_cap
    while True:
        tm, Mp = _fit(Mp0, cm, sub)
        tn, Np = _fit(Np0, cn, 128)
        tk, Kp = _fit(Kp0, ck, 128)
        if working_set(tm, tn, tk, Kp // tk) <= budget:
            break
        if ck > 512:
            ck //= 2
        elif cn > 128:
            cn //= 2
        elif cm > 128:
            cm //= 2
        else:
            break  # tiny budget: fall through and let the compiler cope

    # v7x shards the 'parallel' grid axes over 2 TensorCores: keep >= 2 steps
    # whenever the problem is splittable (harmless on single-TC v5e/v6e).
    if (Mp // tm) * (Np // tn) < 2:
        if Np0 >= 2 * 128 and tn >= 2 * 128:
            tn, Np = _fit(Np0, tn // 2, 128)
        elif Mp0 >= 2 * sub and tm >= 2 * sub:
            tm, Mp = _fit(Mp0, tm // 2, sub)

    return tm, tn, tk, Mp, Np, Kp


# --------------------------------------------------------------------------
# Forward wrapper
# --------------------------------------------------------------------------
@functools.partial(
    jax.jit, static_argnames=("tm", "tn", "tk", "compute_dtype")
)
def lora_offload_linear_forward(
    x, weight, bias=None, *, tm=1024, tn=512, tk=1024,
    compute_dtype=jnp.bfloat16,
):
    """Pallas implementation of LoRaOffloadLinear.forward.

    x:      [..., in_features]
    weight: [in_features, out_features]   (nn.Linear weight transposed)
    bias:   [out_features] or None
    returns [..., out_features] in x.dtype
    """
    *lead, K = x.shape
    Kw, N = weight.shape
    assert K == Kw, (K, Kw)
    M = 1
    for d in lead:
        M *= d

    out_dtype = x.dtype
    if compute_dtype is not None:
        # bf16 MXU inputs, f32 accumulation. Store the weight parameter in
        # compute_dtype at init to make this astype a no-op on the hot path.
        x = x.astype(compute_dtype)
        weight = weight.astype(compute_dtype)
    else:
        weight = weight.astype(x.dtype)

    xbytes = jnp.dtype(x.dtype).itemsize
    obytes = jnp.dtype(out_dtype).itemsize

    vmem_budget = _vmem_budget_bytes()
    tm, tn, tk, Mp, Np, Kp = _select_tiles(
        M, K, N, xbytes, obytes, tm, tn, tk, vmem_budget
    )
    gm, gn, gk = Mp // tm, Np // tn, Kp // tk

    x2d = x.reshape(M, K)
    # Zero K padding contributes nothing to the dot; M/N padding is sliced off.
    if (Mp, Kp) != (M, K):
        x2d = jnp.pad(x2d, ((0, Mp - M), (0, Kp - K)))
    if (Kp, Np) != (K, N):
        weight = jnp.pad(weight, ((0, Kp - K), (0, Np - N)))

    has_bias = bias is not None
    if has_bias:
        bias2d = bias.reshape(1, N).astype(jnp.float32)
        if Np != N:
            bias2d = jnp.pad(bias2d, ((0, 0), (0, Np - N)))

    # Realistic HBM traffic: weight is re-streamed gm times; x is re-streamed
    # gn times in the K-tiled path (once in the single-K-tile path).
    x_traffic = (1 if gk == 1 else gn) * Mp * Kp * xbytes
    w_traffic = gm * Kp * Np * xbytes
    cost = pl.CostEstimate(
        flops=2 * Mp * Np * Kp,
        bytes_accessed=(
            x_traffic + w_traffic + Mp * Np * obytes
            + (gm * Np * 4 if has_bias else 0)
        ),
        transcendentals=0,
    )

    compiler_params = pltpu.CompilerParams(
        dimension_semantics=(
            ("parallel", "parallel") if gk == 1
            else ("parallel", "parallel", "arbitrary")
        ),
        vmem_limit_bytes=vmem_budget,
    )

    if gk == 1:
        # K fits in a single tile: one MXU pass per output block, no scratch.
        # TODO(synk): the x tile only changes on the outer grid axis here; a
        # pipeline_mode=pl.Buffered(1) on its BlockSpec would save one x-slab
        # of VMEM once that option is exercised on this JAX version.
        in_specs = [
            pl.BlockSpec((tm, tk), lambda i, j: (i, 0)),   # x tile
            pl.BlockSpec((tk, tn), lambda i, j: (0, j)),   # weight tile
        ]
        operands = [x2d, weight]
        if has_bias:
            in_specs.append(pl.BlockSpec((1, tn), lambda i, j: (0, j)))
            operands.append(bias2d)
            kernel = _mm_bias_kernel
        else:
            kernel = _mm_kernel
        out2d = pl.pallas_call(
            kernel,
            out_shape=jax.ShapeDtypeStruct((Mp, Np), out_dtype),
            grid_spec=pltpu.PrefetchScalarGridSpec(
                num_scalar_prefetch=0,
                grid=(gm, gn),
                in_specs=in_specs,
                out_specs=pl.BlockSpec((tm, tn), lambda i, j: (i, j)),
            ),
            compiler_params=compiler_params,
            cost_estimate=cost,
        )(*operands)
    else:
        in_specs = [
            pl.BlockSpec((tm, tk), lambda i, j, k: (i, k)),   # x tile
            pl.BlockSpec((tk, tn), lambda i, j, k: (k, j)),   # weight tile
        ]
        operands = [x2d, weight]
        if has_bias:
            in_specs.append(pl.BlockSpec((1, tn), lambda i, j, k: (0, j)))
            operands.append(bias2d)
            kernel = _mm_bias_acc_kernel
        else:
            kernel = _mm_acc_kernel
        out2d = pl.pallas_call(
            kernel,
            out_shape=jax.ShapeDtypeStruct((Mp, Np), out_dtype),
            grid_spec=pltpu.PrefetchScalarGridSpec(
                num_scalar_prefetch=0,
                grid=(gm, gn, gk),
                in_specs=in_specs,
                out_specs=pl.BlockSpec((tm, tn), lambda i, j, k: (i, j)),
                scratch_shapes=[pltpu.VMEM((tm, tn), jnp.float32)],
            ),
            compiler_params=compiler_params,
            cost_estimate=cost,
        )(*operands)

    if (Mp, Np) != (M, N):
        out2d = out2d[:M, :N]
    return out2d.reshape(*lead, N)


if __name__ == "__main__":
    # Small deterministic problem: batch=2, seq=8, in_features=128, out=256.
    batch, seq, in_features, out_features = 2, 8, 128, 256

    key = jax.random.PRNGKey(0)
    kx, kw, kb = jax.random.split(key, 3)

    x = jax.random.normal(kx, (batch, seq, in_features), dtype=jnp.float32)
    # weight stored as [in_features, out_features] (nn.Linear weight transposed)
    weight = jax.random.normal(
        kw, (in_features, out_features), dtype=jnp.float32
    ) * (1.0 / in_features**0.5)
    bias = jax.random.normal(kb, (out_features,), dtype=jnp.float32)

    ref = jnp.einsum("bsk,kn->bsn", x, weight) + bias

    # Default fast path: bf16 MXU inputs, f32 accumulation.
    out_bf16 = jax.block_until_ready(
        lora_offload_linear_forward(x, weight, bias)
    )
    assert out_bf16.shape == (batch, seq, out_features)
    assert out_bf16.dtype == x.dtype
    assert jnp.allclose(out_bf16, ref, atol=5e-2, rtol=5e-2)

    # Full-f32 path (matches the module's default numerics).
    out_f32 = jax.block_until_ready(
        lora_offload_linear_forward(x, weight, bias, compute_dtype=None)
    )
    assert jnp.allclose(out_f32, ref, atol=1e-4, rtol=1e-4)

    # No-bias variant (module constructed from a bias-less Linear).
    out_nb = jax.block_until_ready(
        lora_offload_linear_forward(x, weight, None, compute_dtype=None)
    )
    assert jnp.allclose(out_nb, ref - bias, atol=1e-4, rtol=1e-4)

    # TODO(synk): backward-path gradient compression / Adam offloading
    # (OffloadAdamMMOptim) has no forward-pass effect and is intentionally
    # not implemented here.
    print("KERNEL_OK")
</pallas_src>

<mosaic_0001>
module attributes {stable_mosaic.version = 11 : i64} {
  func.func @_mm_bias_kernel(%arg0: i32, %arg1: i32, %arg2: memref<16x128xbf16, #tpu.memory_space<vmem>>, %arg3: memref<128x128xbf16, #tpu.memory_space<vmem>>, %arg4: memref<1x128xf32, #tpu.memory_space<vmem>>, %arg5: memref<16x128xf32, #tpu.memory_space<vmem>>) attributes {dimension_semantics = [#tpu.dimension_semantics<parallel>, #tpu.dimension_semantics<parallel>], iteration_bounds = array<i64: 1, 2>, scalar_prefetch = 0 : i64, scratch_operands = 0 : i64, tpu.core_type = #tpu.core_type<tc>, window_params = [{transform_indices = @transform_0, window_bounds = array<i64: 16, 128>}, {transform_indices = @transform_1, window_bounds = array<i64: 128, 128>}, {transform_indices = @transform_2, window_bounds = array<i64: 1, 128>}, {transform_indices = @transform_3, window_bounds = array<i64: 16, 128>}]} {
    %c0 = arith.constant 0 : index
    %c0_0 = arith.constant 0 : index
    %0 = vector.load %arg2[%c0, %c0_0] : memref<16x128xbf16, #tpu.memory_space<vmem>>, vector<16x128xbf16>
    %c0_1 = arith.constant 0 : index
    %c0_2 = arith.constant 0 : index
    %1 = vector.load %arg3[%c0_1, %c0_2] : memref<128x128xbf16, #tpu.memory_space<vmem>>, vector<128x128xbf16>
    %cst = arith.constant dense<0.000000e+00> : vector<16x128xf32>
    %2 = tpu.matmul %0, %1, %cst {dimension_numbers = #tpu.dot_dimension_numbers<[1], [0], [0], [1], [0, 0, 1, 1], [], []>} : vector<16x128xbf16>, vector<128x128xbf16>, vector<16x128xf32> -> vector<16x128xf32>
    %c0_3 = arith.constant 0 : index
    %c0_4 = arith.constant 0 : index
    %3 = vector.load %arg4[%c0_3, %c0_4] : memref<1x128xf32, #tpu.memory_space<vmem>>, vector<1x128xf32>
    %4 = vector.broadcast %3 : vector<1x128xf32> to vector<16x128xf32>
    %5 = arith.addf %2, %4 : vector<16x128xf32>
    %c0_5 = arith.constant 0 : index
    %c0_6 = arith.constant 0 : index
    %6 = vector.load %arg5[%c0_5, %c0_6] : memref<16x128xf32, #tpu.memory_space<vmem>>, vector<16x128xf32>
    tpu.vector_store %arg5[%c0_5, %c0_6], %5 {strides = array<i32>} : memref<16x128xf32, #tpu.memory_space<vmem>>, vector<16x128xf32>,
    return
  }
  func.func @transform_0(%arg0: i32, %arg1: i32) -> (i32, i32) {
    %c0_i32 = arith.constant 0 : i32
    %c0_i32_0 = arith.constant 0 : i32
    return %arg0, %c0_i32 : i32, i32
  }
  func.func @transform_1(%arg0: i32, %arg1: i32) -> (i32, i32) {
    %c0_i32 = arith.constant 0 : i32
    %c0_i32_0 = arith.constant 0 : i32
    return %c0_i32, %arg1 : i32, i32
  }
  func.func @transform_2(%arg0: i32, %arg1: i32) -> (i32, i32) {
    %c0_i32 = arith.constant 0 : i32
    %c0_i32_0 = arith.constant 0 : i32
    return %c0_i32, %arg1 : i32, i32
  }
  func.func @transform_3(%arg0: i32, %arg1: i32) -> (i32, i32) {
    %c0_i32 = arith.constant 0 : i32
    return %arg0, %arg1 : i32, i32
  }
}

</mosaic_0001>

<llo_original>
// kernel: lora_offload_linear_forward.1
$region0: #{lora_offload_linear_forward.1}
  #allocation0 [shape = 'u32[]', space=smem, size = 0x4, offset = 0x4, fixed_abs, tag = 'smem constant byte address 0x4 - core index']
  #allocation1 [shape = 'u32[72,128]{1,0:T(1,128)}', space=vmem, size = 0x9000, scoped, tag = 'internal scratch']
  %s0 = inlined_call_operand.vmem [shape: bf16[16,128], index: 0, kind: input, shape index: {}]
  %s1 = inlined_call_operand.vmem [shape: bf16[128,256], index: 1, kind: input, shape index: {}]
  %s2 = inlined_call_operand.vmem [shape: f32[1,256], index: 2, kind: input, shape index: {}]
  %s3 = inlined_call_operand.hbm [shape: f32[16,256], index: 3, kind: output, shape index: {}]
  %s4 = sld [smem:[#allocation0]]
  $region86: #{lora_offload_linear_forward.1} parent=0
    _
  %s6 = ssub.s32 1, %s4
  %s7 = scalar_select 0, %s6, %s4
  $region1: #{lora_offload_linear_forward.1} parent=0
    #allocation2 [shape = 'u8[65536]{0}', space=vmem, size = 0x10000, scoped, tag = 'input window, operand 1']
    #allocation3 [shape = 'u8[16384]{0}', space=vmem, size = 0x4000, scoped, tag = 'output window, operand 0']
    #allocation4 [shape = 's32[2]{0}', space=sflag, size = 0x8, scoped, tag = 'scoped memory for lora_offload_linear_forward.1']
    %8 = vsyncpa [#allocation4], 0
    %s9 = scalar_lea.sflag [#allocation4], 1
    %10 = vsyncpa %s9, 0
    loop: start=0, step=1, limit=4
    $region2: #{lora_offload_linear_forward.1} parent=1 // loop_pre_header
      _
    $region3: #{lora_offload_linear_forward.1} parent=1 // loop_header
      %s12 = sphi 0, %s16
      %p13 = scmp.ge.s32.totalorder %s12, 4
      %s19 = sphi 0, %s31
      %s20 = sphi 0, %s27
      %s21 = sphi 0, %s19
      %s22 = sphi 0, %s20
      %s23 = sphi 0, %s21
      %s24 = sphi 0, %s22
      %s34 = sphi 0, %s36
      %s37 = sphi 0, %s34
      %s38 = sphi 0, %s37
      %s54 = sphi 0, %s38
      %s60 = sphi 0, %s62
      %s63 = sphi 0, %s60
      %s64 = sphi 0, %s63
      %s80 = sphi 0, %s64
      %s86 = sphi 0, %s88
      %s89 = sphi 0, %s86
      %s90 = sphi 0, %s89
      %s106 = sphi 0, %s90
      %s114 = sphi 0, %s116
      %s117 = sphi 0, %s114
      %s118 = sphi 0, %s117
      %s134 = sphi 0, %s118
    $region4: #{lora_offload_linear_forward.1} parent=1 // loop_header_branch
      %15 = sbr.rel (%p13) target = $region8
    $region5: #{lora_offload_linear_forward.1} parent=1 // loop_body
      %s17 = ssub.s32 %s12, 1
      %s18 = ssub.s32 %s12, 2
      %s25 = sadd.s32 1, %s20
      %p26 = scmp.ge.s32.totalorder %s25, 2
      %s27 = scalar_select %p26, 0, %s25
      %s28 = sadd.s32 1, %s19
      %s29 = scalar_select %p26, %s28, %s19
      %p30 = scmp.ge.s32.totalorder %s29, 1
      %s31 = scalar_select %p30, 0, %s29
      %s32 = ssub.s32 %s19, %s31
      %p33 = scmp.eq.s32.totalorder %s32, 0
      %s35 = sadd.s32 %s34, 1
      %s36 = scalar_select %p33, %s34, %s35
      %p39 = pneg %p33
      %p40 = scmp.eq.s32.totalorder %s12, 1
      %p41 = por %p39, %p40
      %p42 = scmp.ne.s32.totalorder %s34, %s37
      %p43 = scmp.eq.s32.totalorder %s12, 0
      %p44 = por %p42, %p43
      %p45 = scmp.ne.s32.totalorder %s34, %s37
      %p46 = scmp.eq.s32.totalorder %s17, 1
      %p47 = por %p45, %p46
      %p48 = scmp.ne.s32.totalorder %s37, %s38
      %p49 = scmp.eq.s32.totalorder %s17, 0
      %p50 = por %p48, %p49
      %p51 = scmp.ne.s32.totalorder %s37, %s38
      %p52 = scmp.eq.s32.totalorder %s18, 1
      %p53 = por %p51, %p52
      %p55 = scmp.ne.s32.totalorder %s38, %s54
      %p56 = scmp.eq.s32.totalorder %s18, 0
      %p57 = por %p55, %p56
      %s58 = ssub.s32 %s20, %s27
      %p59 = scmp.eq.s32.totalorder %s58, 0
      %s61 = sadd.s32 %s60, 1
      %s62 = scalar_select %p59, %s60, %s61
      %p65 = pneg %p59
      %p66 = scmp.eq.s32.totalorder %s12, 1
      %p67 = por %p65, %p66
      %p68 = scmp.ne.s32.totalorder %s60, %s63
      %p69 = scmp.eq.s32.totalorder %s12, 0
      %p70 = por %p68, %p69
      %p71 = scmp.ne.s32.totalorder %s60, %s63
      %p72 = scmp.eq.s32.totalorder %s17, 1
      %p73 = por %p71, %p72
      %p74 = scmp.ne.s32.totalorder %s63, %s64
      %p75 = scmp.eq.s32.totalorder %s17, 0
      %p76 = por %p74, %p75
      %p77 = scmp.ne.s32.totalorder %s63, %s64
      %p78 = scmp.eq.s32.totalorder %s18, 1
      %p79 = por %p77, %p78
      %p81 = scmp.ne.s32.totalorder %s64, %s80
      %p82 = scmp.eq.s32.totalorder %s18, 0
      %p83 = por %p81, %p82
      %s84 = ssub.s32 %s20, %s27
      %p85 = scmp.eq.s32.totalorder %s84, 0
      %s87 = sadd.s32 %s86, 1
      %s88 = scalar_select %p85, %s86, %s87
      %p91 = pneg %p85
      %p92 = scmp.eq.s32.totalorder %s12, 1
      %p93 = por %p91, %p92
      %p94 = scmp.ne.s32.totalorder %s86, %s89
      %p95 = scmp.eq.s32.totalorder %s12, 0
      %p96 = por %p94, %p95
      %p97 = scmp.ne.s32.totalorder %s86, %s89
      %p98 = scmp.eq.s32.totalorder %s17, 1
      %p99 = por %p97, %p98
      %p100 = scmp.ne.s32.totalorder %s89, %s90
      %p101 = scmp.eq.s32.totalorder %s17, 0
      %p102 = por %p100, %p101
      %p103 = scmp.ne.s32.totalorder %s89, %s90
      %p104 = scmp.eq.s32.totalorder %s18, 1
      %p105 = por %p103, %p104
      %p107 = scmp.ne.s32.totalorder %s90, %s106
      %p108 = scmp.eq.s32.totalorder %s18, 0
      %p109 = por %p107, %p108
      %s110 = ssub.s32 %s19, %s31
      %s111 = ssub.s32 %s20, %s27
      %s112 = sor.u32 %s110, %s111
      %p113 = scmp.eq.s32.totalorder %s112, 0
      %s115 = sadd.s32 %s114, 1
      %s116 = scalar_select %p113, %s114, %s115
      %p119 = pneg %p113
      %p120 = scmp.eq.s32.totalorder %s12, 1
      %p121 = por %p119, %p120
      %p122 = scmp.ne.s32.totalorder %s114, %s117
      %p123 = scmp.eq.s32.totalorder %s12, 0
      %p124 = por %p122, %p123
      %p125 = scmp.ne.s32.totalorder %s114, %s117
      %p126 = scmp.eq.s32.totalorder %s17, 1
      %p127 = por %p125, %p126
      %p128 = scmp.ne.s32.totalorder %s117, %s118
      %p129 = scmp.eq.s32.totalorder %s17, 0
      %p130 = por %p128, %p129
      %p131 = scmp.ne.s32.totalorder %s117, %s118
      %p132 = scmp.eq.s32.totalorder %s18, 1
      %p133 = por %p131, %p132
      %p135 = scmp.ne.s32.totalorder %s118, %s134
      %p136 = scmp.eq.s32.totalorder %s18, 0
      %p137 = por %p135, %p136
      %p138 = scmp.le.s32.totalorder 1, %s12
      %p139 = scmp.lt.s32.totalorder %s12, 3
      %p140 = pnand %p138, %p139
      %p141 = pneg %p140
      // Predicated region
      $region9: #{lora_offload_linear_forward.1} parent=5 // pred_check
        _
      $region10: #{lora_offload_linear_forward.1} parent=5 // pred_check_branch
        %143 = sbr.rel (%p140) target = $region12
      $region11: #{lora_offload_linear_forward.1} parent=5 // pred_region
        %s144 = ssub.s32 %s12, 1
        // Predicated region
        $region13: #{lora_offload_linear_forward.1} parent=11 // pred_check
          %p145 = pneg %p50
        $region14: #{lora_offload_linear_forward.1} parent=11 // pred_check_branch
          %147 = sbr.rel (%p145) target = $region16
        $region15: #{lora_offload_linear_forward.1} parent=11 // pred_region
          %s148 = smul.u32 2, %s21
          %p149 = scmp.lt.s32.totalorder %s148, 1
          %s150 = scalar_select %p149, %s148, 1
          %s151 = smul.addr %s150, 4
          %s152 = scalar_lea.vmem %s0, %s151
          %s153 = smul.u32 2, %s21
        $region16: #{lora_offload_linear_forward.1} parent=11 // pred_fallthru
          _
      $region12: #{lora_offload_linear_forward.1} parent=5 // pred_fallthru
        _
      %p154 = scmp.lt.s32.totalorder %s12, 2
      // Predicated region
      $region17: #{lora_offload_linear_forward.1} parent=5 // pred_check
        %p155 = pneg %p154
      $region18: #{lora_offload_linear_forward.1} parent=5 // pred_check_branch
        %157 = sbr.rel (%p155) target = $region20
      $region19: #{lora_offload_linear_forward.1} parent=5 // pred_region
        // Predicated region
        $region21: #{lora_offload_linear_forward.1} parent=19 // pred_check
          %p158 = pneg %p70
        $region22: #{lora_offload_linear_forward.1} parent=19 // pred_check_branch
          %160 = sbr.rel (%p158) target = $region24
        $region23: #{lora_offload_linear_forward.1} parent=19 // pred_region
          %s161 = sand.u32 %s60, 1
          %s162 = sand.u32 %s60, 1
          %s163 = smul.addr %s162, 64
          %s164 = scalar_lea.vmem [#allocation2], %s163
          %s165 = smul.addr %s20, 4
          %s166 = scalar_lea.vmem %s1, %s165
          // Predicated region
          $region25: #{lora_offload_linear_forward.1} parent=23 // pred_check
            _
          $region26: #{lora_offload_linear_forward.1} parent=23 // pred_check_branch
            %168 = sbr.rel (0) target = $region28
          $region27: #{lora_offload_linear_forward.1} parent=23 // pred_region
            // Predicated region
            $region29: #{lora_offload_linear_forward.1} parent=27 // pred_check
              _
            $region30: #{lora_offload_linear_forward.1} parent=27 // pred_check_branch
              %170 = sbr.rel target = $region32
            $region31: #{lora_offload_linear_forward.1} parent=27 // pred_region
              // Predicated region
              $region44: #{lora_offload_linear_forward.1} parent=31 // pred_check
                _
              $region45: #{lora_offload_linear_forward.1} parent=31 // pred_check_branch
                %216 = sbr.rel (0) target = $region47
              $region46: #{lora_offload_linear_forward.1} parent=31 // pred_region
                loop: start=0, step=1, limit=1
                $region48: #{lora_offload_linear_forward.1} parent=46 // loop_pre_header
                  _
                $region49: #{lora_offload_linear_forward.1} parent=46 // loop_header
                  %s218 = sphi 0, %s222
                  %p219 = scmp.ge.s32.totalorder %s218, 1
                  %s223 = sphi %s166, %s166
                  %s224 = sphi %s164, %s164
                $region50: #{lora_offload_linear_forward.1} parent=46 // loop_header_branch
                  %221 = sbr.rel (%p219) target = $region54
                $region51: #{lora_offload_linear_forward.1} parent=46 // loop_body
                  _
                $region52: #{lora_offload_linear_forward.1} parent=46 // loop_footer
                  %s222 = sadd.s32 1, %s218
                $region53: #{lora_offload_linear_forward.1} parent=46 // loop_footer_branch
                  %217 = sbr.rel target = $region49
                $region54: #{lora_offload_linear_forward.1} parent=46 // loop_exit
                  _
                %s226 = ssub.s32 16, 1
                loop: start=0, step=1, limit=1
                $region55: #{lora_offload_linear_forward.1} parent=46 // loop_pre_header
                  _
                $region56: #{lora_offload_linear_forward.1} parent=46 // loop_header
                  %s228 = sphi 0, %s232
                  %p229 = scmp.ge.s32.totalorder %s228, 1
                  %s233 = sphi %s166, %s166
                  %s234 = sphi %s164, %s164
                $region57: #{lora_offload_linear_forward.1} parent=46 // loop_header_branch
                  %231 = sbr.rel (%p229) target = $region61
                $region58: #{lora_offload_linear_forward.1} parent=46 // loop_body
                  %v235 = vld [vmem:[%s233] sm:%s226]
                  %236 = vst [vmem:[%s234] sm:%s226] %v235
                  %v237 = vld [vmem:[%s233 + $0x8] sm:%s226]
                  %238 = vst [vmem:[%s234 + $0x4] sm:%s226] %v237
                  %v239 = vld [vmem:[%s233 + $0x10] sm:%s226]
                  %240 = vst [vmem:[%s234 + $0x8] sm:%s226] %v239
                  %v241 = vld [vmem:[%s233 + $0x18] sm:%s226]
                  %242 = vst [vmem:[%s234 + $0xc] sm:%s226] %v241
                  %v243 = vld [vmem:[%s233 + $0x20] sm:%s226]
                  %244 = vst [vmem:[%s234 + $0x10] sm:%s226] %v243
                  %v245 = vld [vmem:[%s233 + $0x28] sm:%s226]
                  %246 = vst [vmem:[%s234 + $0x14] sm:%s226] %v245
                  %v247 = vld [vmem:[%s233 + $0x30] sm:%s226]
                  %248 = vst [vmem:[%s234 + $0x18] sm:%s226] %v247
                  %v249 = vld [vmem:[%s233 + $0x38] sm:%s226]
                  %250 = vst [vmem:[%s234 + $0x1c] sm:%s226] %v249
                  %v251 = vld [vmem:[%s233 + $0x40] sm:%s226]
                  %252 = vst [vmem:[%s234 + $0x20] sm:%s226] %v251
                  %v253 = vld [vmem:[%s233 + $0x48] sm:%s226]
                  %254 = vst [vmem:[%s234 + $0x24] sm:%s226] %v253
                  %v255 = vld [vmem:[%s233 + $0x50] sm:%s226]
                  %256 = vst [vmem:[%s234 + $0x28] sm:%s226] %v255
                  %v257 = vld [vmem:[%s233 + $0x58] sm:%s226]
                  %258 = vst [vmem:[%s234 + $0x2c] sm:%s226] %v257
                  %v259 = vld [vmem:[%s233 + $0x60] sm:%s226]
                  %260 = vst [vmem:[%s234 + $0x30] sm:%s226] %v259
                  %v261 = vld [vmem:[%s233 + $0x68] sm:%s226]
                  %262 = vst [vmem:[%s234 + $0x34] sm:%s226] %v261
                  %v263 = vld [vmem:[%s233 + $0x70] sm:%s226]
                  %264 = vst [vmem:[%s234 + $0x38] sm:%s226] %v263
                  %v265 = vld [vmem:[%s233 + $0x78] sm:%s226]
                  %266 = vst [vmem:[%s234 + $0x3c] sm:%s226] %v265
                $region59: #{lora_offload_linear_forward.1} parent=46 // loop_footer
                  %s232 = sadd.s32 1, %s228
                $region60: #{lora_offload_linear_forward.1} parent=46 // loop_footer_branch
                  %227 = sbr.rel target = $region56
                $region61: #{lora_offload_linear_forward.1} parent=46 // loop_exit
                  _
              $region47: #{lora_offload_linear_forward.1} parent=31 // pred_fallthru
                _
            $region32: #{lora_offload_linear_forward.1} parent=27 // pred_fallthru
              _
            // Predicated region
            $region33: #{lora_offload_linear_forward.1} parent=27 // pred_check
              _
            $region34: #{lora_offload_linear_forward.1} parent=27 // pred_check_branch
              %172 = sbr.rel (0) target = $region36
            $region35: #{lora_offload_linear_forward.1} parent=27 // pred_region
              %s174 = ssub.s32 16, 1
              loop: start=0, step=1, limit=1
              $region37: #{lora_offload_linear_forward.1} parent=35 // loop_pre_header
                _
              $region38: #{lora_offload_linear_forward.1} parent=35 // loop_header
                %s176 = sphi 0, %s180
                %p177 = scmp.ge.s32.totalorder %s176, 1
                %s181 = sphi %s166, %s166
                %s182 = sphi %s164, %s164
              $region39: #{lora_offload_linear_forward.1} parent=35 // loop_header_branch
                %179 = sbr.rel (%p177) target = $region43
              $region40: #{lora_offload_linear_forward.1} parent=35 // loop_body
                %v183 = vld [vmem:[%s181] sm:%s174]
                %184 = vst [vmem:[%s182] sm:%s174] %v183
                %v185 = vld [vmem:[%s181 + $0x8] sm:%s174]
                %186 = vst [vmem:[%s182 + $0x4] sm:%s174] %v185
                %v187 = vld [vmem:[%s181 + $0x10] sm:%s174]
                %188 = vst [vmem:[%s182 + $0x8] sm:%s174] %v187
                %v189 = vld [vmem:[%s181 + $0x18] sm:%s174]
                %190 = vst [vmem:[%s182 + $0xc] sm:%s174] %v189
                %v191 = vld [vmem:[%s181 + $0x20] sm:%s174]
                %192 = vst [vmem:[%s182 + $0x10] sm:%s174] %v191
                %v193 = vld [vmem:[%s181 + $0x28] sm:%s174]
                %194 = vst [vmem:[%s182 + $0x14] sm:%s174] %v193
                %v195 = vld [vmem:[%s181 + $0x30] sm:%s174]
                %196 = vst [vmem:[%s182 + $0x18] sm:%s174] %v195
                %v197 = vld [vmem:[%s181 + $0x38] sm:%s174]
                %198 = vst [vmem:[%s182 + $0x1c] sm:%s174] %v197
                %v199 = vld [vmem:[%s181 + $0x40] sm:%s174]
                %200 = vst [vmem:[%s182 + $0x20] sm:%s174] %v199
                %v201 = vld [vmem:[%s181 + $0x48] sm:%s174]
                %202 = vst [vmem:[%s182 + $0x24] sm:%s174] %v201
                %v203 = vld [vmem:[%s181 + $0x50] sm:%s174]
                %204 = vst [vmem:[%s182 + $0x28] sm:%s174] %v203
                %v205 = vld [vmem:[%s181 + $0x58] sm:%s174]
                %206 = vst [vmem:[%s182 + $0x2c] sm:%s174] %v205
                %v207 = vld [vmem:[%s181 + $0x60] sm:%s174]
                %208 = vst [vmem:[%s182 + $0x30] sm:%s174] %v207
                %v209 = vld [vmem:[%s181 + $0x68] sm:%s174]
                %210 = vst [vmem:[%s182 + $0x34] sm:%s174] %v209
                %v211 = vld [vmem:[%s181 + $0x70] sm:%s174]
                %212 = vst [vmem:[%s182 + $0x38] sm:%s174] %v211
                %v213 = vld [vmem:[%s181 + $0x78] sm:%s174]
                %214 = vst [vmem:[%s182 + $0x3c] sm:%s174] %v213
              $region41: #{lora_offload_linear_forward.1} parent=35 // loop_footer
                %s180 = sadd.s32 1, %s176
              $region42: #{lora_offload_linear_forward.1} parent=35 // loop_footer_branch
                %175 = sbr.rel target = $region38
              $region43: #{lora_offload_linear_forward.1} parent=35 // loop_exit
                _
            $region36: #{lora_offload_linear_forward.1} parent=27 // pred_fallthru
              _
          $region28: #{lora_offload_linear_forward.1} parent=23 // pred_fallthru
            _
          %267 = vnop
        $region24: #{lora_offload_linear_forward.1} parent=19 // pred_fallthru
          _
        // Predicated region
        $region62: #{lora_offload_linear_forward.1} parent=19 // pred_check
          %p268 = pneg %p96
        $region63: #{lora_offload_linear_forward.1} parent=19 // pred_check_branch
          %270 = sbr.rel (%p268) target = $region65
        $region64: #{lora_offload_linear_forward.1} parent=19 // pred_region
          %p271 = scmp.lt.s32.totalorder %s20, 1
          %s272 = scalar_select %p271, %s20, 1
          %s273 = scalar_lea.vmem %s2, %s272
        $region65: #{lora_offload_linear_forward.1} parent=19 // pred_fallthru
          _
      $region20: #{lora_offload_linear_forward.1} parent=5 // pred_fallthru
        _
      %p274 = scmp.le.s32.totalorder 1, %s12
      %p275 = scmp.lt.s32.totalorder %s12, 3
      %p276 = pnand %p274, %p275
      %p277 = pneg %p276
      // Predicated region
      $region66: #{lora_offload_linear_forward.1} parent=5 // pred_check
        _
      $region67: #{lora_offload_linear_forward.1} parent=5 // pred_check_branch
        %279 = sbr.rel (%p276) target = $region69
      $region68: #{lora_offload_linear_forward.1} parent=5 // pred_region
        %s280 = ssub.s32 %s12, 1
        %s281 = sand.u32 %s63, 1
        %s282 = sand.u32 %s63, 1
        %s283 = smul.addr %s282, 64
        %s284 = scalar_lea.vmem [#allocation2], %s283
        // Predicated region
        $region70: #{lora_offload_linear_forward.1} parent=68 // pred_check
          %p285 = pneg %p76
        $region71: #{lora_offload_linear_forward.1} parent=68 // pred_check_branch
          %287 = sbr.rel (%p285) target = $region73
        $region72: #{lora_offload_linear_forward.1} parent=68 // pred_region
          _
        $region73: #{lora_offload_linear_forward.1} parent=68 // pred_fallthru
          _
        %s288 = smul.u32 2, %s21
        %p289 = scmp.lt.s32.totalorder %s288, 1
        %s290 = scalar_select %p289, %s288, 1
        %s291 = smul.addr %s290, 4
        %s292 = scalar_lea.vmem %s0, %s291
        %p293 = pneg %p50
        %p294 = pneg %p47
        %s295 = sand.u32 %s63, 1
        %s296 = sand.u32 %s63, 1
        %s297 = smul.addr %s296, 64
        %s298 = scalar_lea.vmem [#allocation2], %s297
        %p299 = pneg %p76
        %p300 = pneg %p73
        %p301 = scmp.lt.s32.totalorder %s22, 1
        %s302 = scalar_select %p301, %s22, 1
        %s303 = scalar_lea.vmem %s2, %s302
        %p304 = pneg %p102
        %p305 = pneg %p99
        %p306 = pneg %p130
        %p307 = pneg %p127
        %s308 = sand.u32 %s117, 1
        %s309 = scalar_lea.sflag [#allocation4], %s308
        %s310 = sand.u32 %s117, 1
        %s311 = smul.addr %s310, 16
        %s312 = scalar_lea.vmem [#allocation3], %s311
        %s313 = smul.u32 2, %s21
        %p314 = scmp.lt.s32.totalorder %s313, 1
        %s315 = scalar_select %p314, %s313, 1
        %s316 = smul.addr %s315, 4
        %s317 = scalar_lea.vmem %s0, %s316
        %s318 = smul.u32 2, %s21
        %p319 = scmp.lt.s32.totalorder %s22, 1
        %s320 = scalar_select %p319, %s22, 1
        %s321 = scalar_lea.vmem %s2, %s320
        %s322 = smul.u32 2, %s21
        %v323 = vld [vmem:[%s317] sm:$0xf]
        %v324 = vld [vmem:[%s317 + $0x4] sm:$0xf]
        %v325 = vld [vmem:[%s284] sm:$0xf]
        %v326 = vld [vmem:[%s284 + $0x4] sm:$0xf]
        %v327 = vld [vmem:[%s284 + $0x8] sm:$0xf]
        %v328 = vld [vmem:[%s284 + $0xc] sm:$0xf]
        %v329 = vld [vmem:[%s284 + $0x10] sm:$0xf]
        %v330 = vld [vmem:[%s284 + $0x14] sm:$0xf]
        %v331 = vld [vmem:[%s284 + $0x18] sm:$0xf]
        %v332 = vld [vmem:[%s284 + $0x1c] sm:$0xf]
        %v333 = vld [vmem:[%s284 + $0x20] sm:$0xf]
        %v334 = vld [vmem:[%s284 + $0x24] sm:$0xf]
        %v335 = vld [vmem:[%s284 + $0x28] sm:$0xf]
        %v336 = vld [vmem:[%s284 + $0x2c] sm:$0xf]
        %v337 = vld [vmem:[%s284 + $0x30] sm:$0xf]
        %v338 = vld [vmem:[%s284 + $0x34] sm:$0xf]
        %v339 = vld [vmem:[%s284 + $0x38] sm:$0xf]
        %v340 = vld [vmem:[%s284 + $0x3c] sm:$0xf]
        %v341 = vld [vmem:[%s321] sm:$0x1]
        %v343 = vperm.slane %v341, 0
        %v347 = vunpack.c.l.b16 %v323
        %v348 = vunpack.c.l.b16 %v324
        %v349 = vpack.c.b16 %v348, %v347
        %v367 = vunpack.c.l.b16 %v325
        %v368 = vunpack.c.l.b16 %v326
        %v369 = vunpack.c.l.b16 %v327
        %v370 = vunpack.c.l.b16 %v328
        %v371 = vunpack.c.l.b16 %v329
        %v372 = vunpack.c.l.b16 %v330
        %v373 = vunpack.c.l.b16 %v331
        %v374 = vunpack.c.l.b16 %v332
        %v375 = vunpack.c.l.b16 %v333
        %v376 = vunpack.c.l.b16 %v334
        %v377 = vunpack.c.l.b16 %v335
        %v378 = vunpack.c.l.b16 %v336
        %v379 = vunpack.c.l.b16 %v337
        %v380 = vunpack.c.l.b16 %v338
        %v381 = vunpack.c.l.b16 %v339
        %v382 = vunpack.c.l.b16 %v340
        %v383 = vpack.c.b16 %v368, %v367
        %v384 = vpack.c.b16 %v370, %v369
        %v385 = vpack.c.b16 %v372, %v371
        %v386 = vpack.c.b16 %v374, %v373
        %v387 = vpack.c.b16 %v376, %v375
        %v388 = vpack.c.b16 %v378, %v377
        %v389 = vpack.c.b16 %v380, %v379
        %v390 = vpack.c.b16 %v382, %v381
        %399 = vmatpush.bf16.msra.mxu0 %v390
        %400 = vmatpush.bf16.msra.mxu0 %v389
        %401 = vmatpush.bf16.msra.mxu0 %v388
        %402 = vmatpush.bf16.msra.mxu0 %v387
        %403 = vmatpush.bf16.msra.mxu0 %v386
        %404 = vmatpush.bf16.msra.mxu0 %v385
        %405 = vmatpush.bf16.msra.mxu0 %v384
        %406 = vmatpush.bf16.msra.mxu0 %v383
        %407 = vmatmul.bf16.gmra.mxu0 %v349
        %v408 = vpop.f32.mrf.mxu0
        %v409 = vadd.f32 %v343, %v408
        %v410 = vpop.f32.mrf.mxu0
        %v411 = vadd.f32 %v343, %v410
        %412 = vdwg.mxu0
        %413 = vst [vmem:[%s312] sm:$0xff] %v409
        %414 = vst [vmem:[%s312 + $0x8] sm:$0xff] %v411
        %s415 = sand.u32 %s117, 1
        %s416 = scalar_lea.sflag [#allocation4], %s415
        %s417 = sand.u32 %s117, 1
        %s418 = smul.addr %s417, 16
        %s419 = scalar_lea.vmem [#allocation3], %s418
        // Predicated region
        $region74: #{lora_offload_linear_forward.1} parent=68 // pred_check
          %p420 = pneg %p127
        $region75: #{lora_offload_linear_forward.1} parent=68 // pred_check_branch
          %422 = sbr.rel (%p420) target = $region77
        $region76: #{lora_offload_linear_forward.1} parent=68 // pred_region
          %s423 = smul.u32 2, %s21
          %425 = vsyncadd %s416, 0
          %s426 = smul.addr %s423, 2
          %s427 = sadd.s32 %s22, %s426
          %s428 = smul.addr %s427, 8
          %s429 = scalar_lea.hbm %s3, %s428
          %s430 = sshll.u32 %s419, 4
          %s431 = int_to_ptr.vmem [resolvable:$true] %s430
          %s432 = sshll.u32 %s429, 4
          %s433 = int_to_ptr.hbm [resolvable:$true] %s432
          %438 = dma.vmem_to_hbm [thread:$0]  %s431, 256, %s433, %s416, 128, 256, 8
        $region77: #{lora_offload_linear_forward.1} parent=68 // pred_fallthru
          _
      $region69: #{lora_offload_linear_forward.1} parent=5 // pred_fallthru
        _
      %p439 = scmp.le.s32.totalorder 2, %s12
      // Predicated region
      $region78: #{lora_offload_linear_forward.1} parent=5 // pred_check
        %p440 = pneg %p439
      $region79: #{lora_offload_linear_forward.1} parent=5 // pred_check_branch
        %442 = sbr.rel (%p440) target = $region81
      $region80: #{lora_offload_linear_forward.1} parent=5 // pred_region
        %s443 = ssub.s32 %s12, 2
        // Predicated region
        $region82: #{lora_offload_linear_forward.1} parent=80 // pred_check
          %p444 = pneg %p133
        $region83: #{lora_offload_linear_forward.1} parent=80 // pred_check_branch
          %446 = sbr.rel (%p444) target = $region85
        $region84: #{lora_offload_linear_forward.1} parent=80 // pred_region
          %s447 = sand.u32 %s118, 1
          %s448 = scalar_lea.sflag [#allocation4], %s447
          %s449 = sand.u32 %s118, 1
          %s450 = smul.addr %s449, 16
          %s451 = scalar_lea.vmem [#allocation3], %s450
          %453 = dma.done %s448, 256
        $region85: #{lora_offload_linear_forward.1} parent=80 // pred_fallthru
          _
      $region81: #{lora_offload_linear_forward.1} parent=5 // pred_fallthru
        _
    $region6: #{lora_offload_linear_forward.1} parent=1 // loop_footer
      %s16 = sadd.s32 1, %s12
    $region7: #{lora_offload_linear_forward.1} parent=1 // loop_footer_branch
      %11 = sbr.rel target = $region3
    $region8: #{lora_offload_linear_forward.1} parent=1 // loop_exit
      _
    %454 = vsyncpa [#allocation4], 1
    %s455 = scalar_lea.sflag [#allocation4], 1
    %456 = vsyncpa %s455, 1

</llo_original>
